<compile_context>
chip_gen: v5e
topology: v5e:2x2
jax: 0.10.0
libtpu: 0.0.40
codegen_flags: <defaults>
</compile_context>

<pallas_src>
import functools

import jax
import jax.numpy as jnp
from jax.experimental import pallas as pl
from jax.experimental.pallas import tpu as pltpu


# ---------------------------------------------------------------------------
# Kernel 1 (the eval forward): hard straight-through gates from the global
# gate scores.  Layout is (2, S): seq axis on lanes (lane-dense).
# ---------------------------------------------------------------------------
def _global_hard_gate_kernel(g_ref, o_ref):
    g = g_ref[...]                                            # (2, TS) f32
    # Winner-takes-all with ties -> index 0 (matches torch.max first-max-wins,
    # and argmax(softmax(g)) == argmax(g)).  For the 2-class straight-through
    # estimator, (y_hard - y_soft) + y_soft is bit-exactly y_hard, so we emit
    # the one-hot directly.
    # NOTE: NaN scores select gate 1 here (g0 >= g1 is False for NaN) instead
    # of propagating NaN like torch's softmax would.
    hard0 = (g[0:1, :] >= g[1:2, :]).astype(jnp.float32)      # (1, TS)
    o_ref[0:1, :] = hard0
    o_ref[1:2, :] = 1.0 - hard0


def global_hard_gates(global_gate_score, *, tile_s=128 * 1024):
    """(seq_len, 2) raw scores -> (2, seq_len) hard one-hot gates (float32)."""
    S, two = global_gate_score.shape
    assert two == 2
    # Layout plumbing only: present a lane-dense (2, S) slab to the kernel.
    g_t = global_gate_score.T.astype(jnp.float32)             # (2, S)

    # Small S: one full-extent block (always legal).  Large S: lane tiles that
    # are a multiple of 128 so read/compute/write pipeline and both v7x TCs
    # can share the stream; the partial last block is handled by Pallas.
    ts = S if S <= tile_s else tile_s
    grid = (pl.cdiv(S, ts),)

    return pl.pallas_call(
        _global_hard_gate_kernel,
        out_shape=jax.ShapeDtypeStruct((2, S), jnp.float32),
        grid_spec=pltpu.PrefetchScalarGridSpec(
            num_scalar_prefetch=0,
            grid=grid,
            in_specs=[pl.BlockSpec((2, ts), lambda i: (0, i))],
            out_specs=pl.BlockSpec((2, ts), lambda i: (0, i)),
        ),
        compiler_params=pltpu.CompilerParams(
            dimension_semantics=("parallel",),
        ),
    )(g_t)


# ---------------------------------------------------------------------------
# Kernel 2 (training-path helper, NOT used by the eval forward):
#   logits = x2d @ W^T   with W in the native nn.Linear layout (2, d_model).
# Mem-bound: cost is the HBM stream of x2d, so use large row tiles and a bf16
# stream (f32 accumulation on the MXU).
# ---------------------------------------------------------------------------
def _gate_linear_kernel(x_ref, w_ref, o_ref):
    # x: (tm, D), w: (N, D) lane-dense; contract on D -> (tm, N).
    o_ref[...] = jax.lax.dot_general(
        x_ref[...], w_ref[...],
        dimension_numbers=(((1,), (1,)), ((), ())),
        preferred_element_type=jnp.float32,
    ).astype(o_ref.dtype)


def _x_stream_budget_bytes():
    """Generation-aware budget for the double-buffered x stream."""
    vmem_cap = None
    try:
        info = pltpu.get_tpu_info()
        vmem_cap = int(getattr(info, "vmem_capacity_bytes"))
    except Exception:
        vmem_cap = None
    if vmem_cap is not None and vmem_cap >= 100 * 1024 * 1024:
        # v5e / v6e: 128 MiB physical VMEM -> generous x budget.
        return 24 * 1024 * 1024
    # v7x (64 MiB per TC, 2 TCs per chip) or unknown: stay conservative.
    return 16 * 1024 * 1024


def _pick_tm(M, D, itemsize, x_budget_bytes):
    """Row-tile size: fill the per-buffer share of the x budget (no tm cap)."""
    per_buf = max(x_budget_bytes // 2, 8 * D * itemsize)
    tm = per_buf // (D * itemsize)
    if tm >= M:
        return M                       # single full-extent block (always legal)
    return max(8, (tm // 8) * 8)


def gate_linear(x2d, w, *, tm=None, stream_dtype=jnp.bfloat16):
    """logits = x2d @ w.T  (w in nn.Linear layout: (out_features, in_features)).

    Output is float32 (accumulator dtype); note this differs from nn.Linear's
    output dtype when the inputs are bf16, which is fine for the EMA update.
    """
    M, D = x2d.shape
    N, Dw = w.shape
    assert Dw == D

    # Stream the dominant (M, D) read in bf16: halves HBM traffic, MXU takes
    # bf16 natively on v5e/v6e/v7x; accumulation stays f32.
    if stream_dtype is not None:
        x2d = x2d.astype(stream_dtype)
        w = w.astype(stream_dtype)

    x_itemsize = jnp.dtype(x2d.dtype).itemsize
    w_itemsize = jnp.dtype(w.dtype).itemsize
    x_budget = _x_stream_budget_bytes()
    if tm is None:
        tm = _pick_tm(M, D, x_itemsize, x_budget)

    # Scoped-VMEM limit: cover the actual double-buffered working set (x, w,
    # out) with headroom.  v5e's default is only 16 MiB, so set it explicitly.
    x_bytes = 2 * tm * D * x_itemsize
    w_bytes = 2 * N * D * w_itemsize
    o_bytes = 2 * tm * N * 4
    vmem_limit = max(x_budget, x_bytes + w_bytes + o_bytes) + 8 * 1024 * 1024

    grid = (pl.cdiv(M, tm),)           # partial last block handled by Pallas
    return pl.pallas_call(
        _gate_linear_kernel,
        out_shape=jax.ShapeDtypeStruct((M, N), jnp.float32),
        grid_spec=pltpu.PrefetchScalarGridSpec(
            num_scalar_prefetch=0,
            grid=grid,
            in_specs=[
                # pipeline_mode=pl.Buffered(3) is a cheap knob to sweep here
                # if profiling ever shows exposed DMA at step boundaries.
                pl.BlockSpec((tm, D), lambda i: (i, 0)),
                pl.BlockSpec((N, D), lambda i: (0, 0)),   # lane-dense weight
            ],
            # N=2 < 128 lanes -> masked stores, but the write volume is
            # negligible vs. the (M, D) input stream.
            out_specs=pl.BlockSpec((tm, N), lambda i: (i, 0)),
        ),
        compiler_params=pltpu.CompilerParams(
            dimension_semantics=("parallel",),   # v7x: rows split across 2 TCs
            vmem_limit_bytes=int(vmem_limit),
        ),
    )(x2d, w)


# ---------------------------------------------------------------------------
# Module forward (eval mode).
# ---------------------------------------------------------------------------
@functools.partial(jax.jit, static_argnames=("training",))
def meg_gated_attention_global_mask_forward(
    x, gate_w, global_gate_score, smoothing_factor, training=False
):
    """Returns (gate0, gate1), each (seq_len,) float32 — matches PyTorch's
    `gate_scores.unbind(-1)`.

    The gate-linear matmul is intentionally NOT computed here: in eval mode
    the PyTorch module discards its result and it would be ~100% of the HBM
    traffic.  Use `gate_linear` directly when logits are needed (e.g. for the
    training-mode EMA update).
    """
    if training:
        # TODO(synk): training-mode path (Gumbel-noise sampling + stateful EMA
        # update of global_gate_score from logits.mean(0)) is not implemented.
        raise NotImplementedError("training-mode forward not implemented")
    del x, gate_w, smoothing_factor                 # dead in eval mode
    gates = global_hard_gates(global_gate_score)    # (2, S), rows contiguous
    return gates[0], gates[1]


# ---------------------------------------------------------------------------
# Demo / correctness check
# ---------------------------------------------------------------------------
if __name__ == "__main__":
    d_model, seq_len, batch = 32, 8, 2

    key = jax.random.PRNGKey(0)
    k_w, k_g, k_x = jax.random.split(key, 3)

    # Shapes per module __init__:
    #   nn.Linear(d_model, 2, bias=False).weight : (2, d_model)
    #   global_gate_score                        : (seq_len, 2)
    #   smoothing_factor                         : scalar 0.9
    gate_w = jax.random.normal(k_w, (2, d_model), jnp.float32) / jnp.sqrt(
        jnp.float32(d_model)
    )
    global_gate_score = jax.random.normal(k_g, (seq_len, 2), jnp.float32)
    smoothing_factor = jnp.float32(0.9)
    x = jax.random.normal(k_x, (batch, seq_len, d_model), jnp.float32)

    g0, g1 = meg_gated_attention_global_mask_forward(
        x, gate_w, global_gate_score, smoothing_factor, training=False
    )
    jax.block_until_ready((g0, g1))

    # Pure-JAX reference (exact torch eval-mode arithmetic).
    y_soft = jax.nn.softmax(global_gate_score, axis=-1)
    y_hard = jax.nn.one_hot(jnp.argmax(y_soft, axis=-1), 2, dtype=jnp.float32)
    ret_ref = (y_hard - y_soft) + y_soft

    assert g0.shape == (seq_len,) and g1.shape == (seq_len,)
    assert bool(jnp.array_equal(g0, ret_ref[:, 0]))
    assert bool(jnp.array_equal(g1, ret_ref[:, 1]))

    # Also exercise the (optional, training-path) gate-linear kernel with the
    # bf16 stream + f32 accumulation used in production.
    x2d = x.reshape(batch * seq_len, d_model)
    logits = gate_linear(x2d, gate_w)
    jax.block_until_ready(logits)
    logits_ref = jnp.dot(
        x2d.astype(jnp.bfloat16),
        gate_w.astype(jnp.bfloat16).T,
        preferred_element_type=jnp.float32,
    )
    assert logits.shape == (batch * seq_len, 2)
    assert jnp.allclose(logits, logits_ref, atol=1e-3, rtol=1e-3)
    # Sanity vs. full-f32 math (bf16 stream costs only a little precision).
    assert jnp.allclose(logits, x2d @ gate_w.T, atol=3e-2, rtol=3e-2)

    print("KERNEL_OK")
</pallas_src>

<mosaic_0001>
module attributes {stable_mosaic.version = 11 : i64} {
  func.func @_global_hard_gate_kernel(%arg0: i32, %arg1: memref<2x8xf32, #tpu.memory_space<vmem>>, %arg2: memref<2x8xf32, #tpu.memory_space<vmem>>) attributes {dimension_semantics = [#tpu.dimension_semantics<parallel>], iteration_bounds = array<i64: 1>, scalar_prefetch = 0 : i64, scratch_operands = 0 : i64, tpu.core_type = #tpu.core_type<tc>, window_params = [{transform_indices = @transform_0, window_bounds = array<i64: 2, 8>}, {transform_indices = @transform_1, window_bounds = array<i64: 2, 8>}]} {
    %c0 = arith.constant 0 : index
    %c0_0 = arith.constant 0 : index
    %0 = vector.load %arg1[%c0, %c0_0] : memref<2x8xf32, #tpu.memory_space<vmem>>, vector<2x8xf32>
    %1 = vector.extract_strided_slice %0 {offsets = [0, 0], sizes = [1, 8], strides = [1, 1]} : vector<2x8xf32> to vector<1x8xf32>
    %2 = vector.extract_strided_slice %0 {offsets = [1, 0], sizes = [1, 8], strides = [1, 1]} : vector<2x8xf32> to vector<1x8xf32>
    %3 = arith.cmpf oge, %1, %2 : vector<1x8xf32>
    %4 = arith.extui %3 : vector<1x8xi1> to vector<1x8xi32>
    %5 = arith.sitofp %4 : vector<1x8xi32> to vector<1x8xf32>
    %c0_1 = arith.constant 0 : index
    %c0_2 = arith.constant 0 : index
    %6 = vector.load %arg2[%c0_1, %c0_2] : memref<2x8xf32, #tpu.memory_space<vmem>>, vector<1x8xf32>
    tpu.vector_store %arg2[%c0_1, %c0_2], %5 {strides = array<i32>} : memref<2x8xf32, #tpu.memory_space<vmem>>, vector<1x8xf32>,
    %cst = arith.constant 1.000000e+00 : f32
    %7 = vector.broadcast %cst : f32 to vector<1x8xf32>
    %8 = arith.subf %7, %5 : vector<1x8xf32>
    %c1 = arith.constant 1 : index
    %c0_3 = arith.constant 0 : index
    %9 = vector.load %arg2[%c1, %c0_3] : memref<2x8xf32, #tpu.memory_space<vmem>>, vector<1x8xf32>
    tpu.vector_store %arg2[%c1, %c0_3], %8 {strides = array<i32>} : memref<2x8xf32, #tpu.memory_space<vmem>>, vector<1x8xf32>,
    return
  }
  func.func @transform_0(%arg0: i32) -> (i32, i32) {
    %c0_i32 = arith.constant 0 : i32
    %c0_i32_0 = arith.constant 0 : i32
    return %c0_i32, %arg0 : i32, i32
  }
  func.func @transform_1(%arg0: i32) -> (i32, i32) {
    %c0_i32 = arith.constant 0 : i32
    %c0_i32_0 = arith.constant 0 : i32
    return %c0_i32, %arg0 : i32, i32
  }
}

</mosaic_0001>

<llo_original>
// kernel: meg_gated_attention_global_mask_forward.1
$region0: #{meg_gated_attention_global_mask_forward.1}
  #allocation0 [shape = 'u32[]', space=smem, size = 0x4, offset = 0x4, fixed_abs, tag = 'smem constant byte address 0x4 - core index']
  #allocation1 [shape = 'u32[72,128]{1,0:T(1,128)}', space=vmem, size = 0x9000, scoped, tag = 'internal scratch']
  %s0 = inlined_call_operand.hbm [shape: f32[2,8], index: 0, kind: input, shape index: {}]
  %s1 = inlined_call_operand.vmem [shape: f32[2,8], index: 1, kind: output, shape index: {}]
  %s2 = sld [smem:[#allocation0]]
  $region18: #{meg_gated_attention_global_mask_forward.1} parent=0
    _
  %s4 = ssub.s32 1, %s2
  %s5 = scalar_select 0, %s4, %s2
  $region1: #{meg_gated_attention_global_mask_forward.1} parent=0
    #allocation2 [shape = 'u8[1024]{0}', space=vmem, size = 0x400, scoped, tag = 'input window, operand 0, single buffered']
    #allocation3 [shape = 's32[1]{0}', space=sflag, size = 0x4, scoped, tag = 'scoped memory for meg_gated_attention_global_mask_forward.1']
    %6 = vsyncpa [#allocation3], 0
    // Predicated region
    $region2: #{meg_gated_attention_global_mask_forward.1} parent=1 // pred_check
      _
    $region3: #{meg_gated_attention_global_mask_forward.1} parent=1 // pred_check_branch
      %8 = sbr.rel (0) target = $region5
    $region4: #{meg_gated_attention_global_mask_forward.1} parent=1 // pred_region
      %10 = vsyncadd [#allocation3], 0
      %s12 = sshll.u32 %s0, 4
      %s13 = int_to_ptr.hbm [resolvable:$true] %s12
      %s14 = sshll.u32 [#allocation2], 4
      %s15 = int_to_ptr.vmem [resolvable:$true] %s14
      %17 = dma.hbm_to_vmem [thread:$0]  %s13, 32, %s15, [#allocation3]
    $region5: #{meg_gated_attention_global_mask_forward.1} parent=1 // pred_fallthru
      _
    // Predicated region
    $region6: #{meg_gated_attention_global_mask_forward.1} parent=1 // pred_check
      _
    $region7: #{meg_gated_attention_global_mask_forward.1} parent=1 // pred_check_branch
      %19 = sbr.rel (0) target = $region9
    $region8: #{meg_gated_attention_global_mask_forward.1} parent=1 // pred_region
      %21 = dma.done [#allocation3], 32
    $region9: #{meg_gated_attention_global_mask_forward.1} parent=1 // pred_fallthru
      _
    %v22 = vld [vmem:[#allocation2] sm:$0x3]
    %v24 = vrot.slane %v22, 1
    %vm26 = vcmp.ge.f32.partialorder %v22, %v24
    %v27 = vsel %vm26, 1, 0
    %v28 = vcvt.s32.f32 %v27
    %vm29 = vcmask 57344
    %30 = vst.msk [vmem:[%s1] sm:$0x1] %vm29, %v28
    %v31 = vsub.f32 1.0, %v28
    %32 = vst.msk [vmem:[%s1 + $0x1] sm:$0x1] %vm29, %v31
    // Predicated region
    $region10: #{meg_gated_attention_global_mask_forward.1} parent=1 // pred_check
      _
    $region11: #{meg_gated_attention_global_mask_forward.1} parent=1 // pred_check_branch
      %34 = sbr.rel (0) target = $region13
    $region12: #{meg_gated_attention_global_mask_forward.1} parent=1 // pred_region
      _
    $region13: #{meg_gated_attention_global_mask_forward.1} parent=1 // pred_fallthru
      _
    // Predicated region
    $region14: #{meg_gated_attention_global_mask_forward.1} parent=1 // pred_check
      _
    $region15: #{meg_gated_attention_global_mask_forward.1} parent=1 // pred_check_branch
      %36 = sbr.rel (0) target = $region17
    $region16: #{meg_gated_attention_global_mask_forward.1} parent=1 // pred_region
      _
    $region17: #{meg_gated_attention_global_mask_forward.1} parent=1 // pred_fallthru
      _
    %37 = vsyncpa [#allocation3], 1

</llo_original>
